<compile_context>
chip_gen: v6e
topology: v6e:2x2x1
jax: 0.10.0
libtpu: 0.0.40
codegen_flags: <defaults>
</compile_context>

<pallas_src>
import jax
import jax.numpy as jnp
from jax.experimental import pallas as pl
from jax.experimental.pallas import tpu as pltpu

DEPTH = 3
BN_EPS = 1e-5
LANE = 128           # TPU lane width; all feature dims are padded to this.
MAX_TILE_I = 1024    # node row tile of A / H output (per perf review: 1024-2048)
MAX_TILE_K = 512     # reduction (column) tile of A


# ----------------------------- kernels ---------------------------------------

def gcn_layer_kernel(ktab_ref, kcnt_ref, a_ref, h_ref, w_ref, b_ref, o_ref, acc_ref):
    """One GCN layer tile:  H_out = relu((A_hat @ H) @ W' + b').

    Grid = (row_tiles, max_nnz_k_slots).  kcnt_ref[i] gates slots that have no
    nonzero adjacency block (their A/H DMAs are deduped by repeating the last
    valid block index in ktab).
    """
    kk = pl.program_id(1)

    @pl.when(kk == 0)
    def _():
        acc_ref[...] = jnp.zeros_like(acc_ref)

    @pl.when(kk < kcnt_ref[pl.program_id(0)])
    def _():
        acc_ref[...] += jnp.dot(a_ref[...], h_ref[...],
                                preferred_element_type=jnp.float32)

    @pl.when(kk == pl.num_programs(1) - 1)
    def _():
        # Epilogue matmul (tile_i x 128 @ 128 x 128) on the f32 accumulator is
        # nearly free on the MXU; keeps full f32 precision for W'/bias/BN fold.
        z = jnp.dot(acc_ref[...], w_ref[...],
                    preferred_element_type=jnp.float32) + b_ref[...]
        o_ref[...] = jnp.maximum(z, 0.0).astype(o_ref.dtype)


def head_kernel(p_ref, h_ref, w1_ref, b1_ref, w2_ref, b2_ref, out_ref, acc_ref):
    """pooled = P @ H (K-reduction over node tiles); then lin1/ReLU/lin2."""
    k = pl.program_id(0)

    @pl.when(k == 0)
    def _():
        acc_ref[...] = jnp.zeros_like(acc_ref)

    acc_ref[...] += jnp.dot(p_ref[...], h_ref[...].astype(jnp.float32),
                            preferred_element_type=jnp.float32)

    @pl.when(k == pl.num_programs(0) - 1)
    def _():
        z = jnp.dot(acc_ref[...], w1_ref[...],
                    preferred_element_type=jnp.float32) + b1_ref[...]
        z = jnp.maximum(z, 0.0)
        out_ref[...] = (jnp.dot(z, w2_ref[...],
                                preferred_element_type=jnp.float32) + b2_ref[...]
                        ).astype(out_ref.dtype)


# --------------------------- pallas_call wrappers -----------------------------

def _gcn_layer(a, h, w, b, ktab, kcnt, tile_i, tile_k, max_nnz):
    n_pad, lane = h.shape
    n_rows = n_pad // tile_i

    # Double-buffered VMEM footprint -> explicit limit (32 MiB floor clears v5e's
    # 16 MiB scoped default; 64 MiB cap stays inside v7x physical VMEM).
    footprint = (2 * (tile_i * tile_k * 2 + tile_k * lane * 2 + tile_i * lane * 2)
                 + tile_i * lane * 4 + 2 * lane * lane * 4 + (1 << 16))
    vmem_limit = int(min(max(2 * footprint, 32 << 20), 64 << 20))

    return pl.pallas_call(
        gcn_layer_kernel,
        out_shape=jax.ShapeDtypeStruct((n_pad, lane), jnp.bfloat16),
        grid_spec=pltpu.PrefetchScalarGridSpec(
            num_scalar_prefetch=2,
            grid=(n_rows, max_nnz),
            in_specs=[
                # A_hat row-tile x (data-dependent) nonzero k-tile
                pl.BlockSpec((tile_i, tile_k),
                             lambda i, kk, kt, kc: (i, kt[i * max_nnz + kk])),
                # matching H k-tile
                pl.BlockSpec((tile_k, lane),
                             lambda i, kk, kt, kc: (kt[i * max_nnz + kk], 0)),
                # folded weight / bias, resident
                pl.BlockSpec((lane, lane), lambda i, kk, kt, kc: (0, 0)),
                pl.BlockSpec((1, lane), lambda i, kk, kt, kc: (0, 0)),
            ],
            out_specs=pl.BlockSpec((tile_i, lane), lambda i, kk, kt, kc: (i, 0)),
            scratch_shapes=[pltpu.VMEM((tile_i, lane), jnp.float32)]),
        compiler_params=pltpu.CompilerParams(
            dimension_semantics=("parallel", "arbitrary"),
            vmem_limit_bytes=vmem_limit),
        cost_estimate=pl.CostEstimate(
            flops=2 * n_rows * max_nnz * tile_i * tile_k * lane
                  + 2 * n_pad * lane * lane,
            transcendentals=0,
            bytes_accessed=n_rows * max_nnz * (tile_i * tile_k + tile_k * lane) * 2
                           + n_pad * lane * 2 + 2 * lane * lane * 4),
    )(ktab, kcnt, a, h, w, b)


def _head(p, h, w1, b1, w2, b2, tile_n):
    g_pad, n_pad = p.shape
    lane = h.shape[1]
    return pl.pallas_call(
        head_kernel,
        out_shape=jax.ShapeDtypeStruct((g_pad, lane), jnp.float32),
        grid_spec=pltpu.PrefetchScalarGridSpec(
            num_scalar_prefetch=0,
            grid=(n_pad // tile_n,),
            in_specs=[pl.BlockSpec((g_pad, tile_n), lambda k: (0, k)),
                      pl.BlockSpec((tile_n, lane), lambda k: (k, 0)),
                      pl.BlockSpec((lane, lane), lambda k: (0, 0)),
                      pl.BlockSpec((1, lane), lambda k: (0, 0)),
                      pl.BlockSpec((lane, lane), lambda k: (0, 0)),
                      pl.BlockSpec((1, lane), lambda k: (0, 0))],
            out_specs=pl.BlockSpec((g_pad, lane), lambda k: (0, 0)),
            scratch_shapes=[pltpu.VMEM((g_pad, lane), jnp.float32)]),
        compiler_params=pltpu.CompilerParams(dimension_semantics=("arbitrary",)),
    )(p, h, w1, b1, w2, b2)


# ------------------------------ plain-JAX glue --------------------------------

def _round_up(x, m):
    return (x + m - 1) // m * m


def _pow2_tile(n, cap):
    t = LANE
    while t * 2 <= min(n, cap):
        t *= 2
    return t


def _choose_tiles(num_nodes, cap_i=MAX_TILE_I, cap_k=MAX_TILE_K):
    """Row/k tiles as pow2 multiples of 128; keep >=2 row tiles when the graph
    allows so the 'parallel' axis can feed both v7x TensorCores."""
    n128 = _round_up(max(num_nodes, 1), LANE)
    tile_i = _pow2_tile(max(n128 // 2, LANE), cap_i)
    tile_k = min(_pow2_tile(n128, cap_k), tile_i)   # tile_k | tile_i | n_pad
    n_pad = _round_up(num_nodes, tile_i)
    return n_pad, tile_i, tile_k


def _pad2(a, rows, cols):
    return jnp.pad(a, ((0, rows - a.shape[0]), (0, cols - a.shape[1])))


def build_norm_adj(edge_index, num_nodes):
    """Dense D^{-1/2}(A + I)D^{-1/2}, with A[dst, src] = 1 per edge (GCNConv semantics)."""
    src, dst = edge_index[0], edge_index[1]
    a = jnp.zeros((num_nodes, num_nodes), jnp.float32)
    a = a.at[dst, src].add(1.0)
    a = a + jnp.eye(num_nodes, dtype=jnp.float32)
    deg = a.sum(axis=1)
    dinv = jnp.where(deg > 0, jax.lax.rsqrt(deg), 0.0)
    return a * dinv[:, None] * dinv[None, :]


def build_block_schedule(a_pad, tile_i, tile_k):
    """Per row-tile list of nonzero k-tiles of A_hat (block-diagonal over batched
    graphs). Dead slots repeat the last valid index so Pallas dedupes the DMA."""
    n_pad = a_pad.shape[0]
    n_rows, n_k = n_pad // tile_i, n_pad // tile_k
    blk = (a_pad != 0).reshape(n_rows, tile_i, n_k, tile_k).any(axis=(1, 3))
    counts = blk.sum(axis=1).astype(jnp.int32)                    # (R,)
    max_nnz = max(int(counts.max()), 1)                           # static (eager only)
    order = jnp.argsort(jnp.where(blk, 0, 1), axis=1).astype(jnp.int32)  # nonzero first
    ktab = order[:, :max_nnz]
    slot = jnp.arange(max_nnz, dtype=jnp.int32)[None, :]
    last = jnp.take_along_axis(ktab, jnp.maximum(counts - 1, 0)[:, None], axis=1)
    last = jnp.where(counts[:, None] > 0, last, 0)
    ktab = jnp.where(slot < counts[:, None], ktab, last)
    return ktab.reshape(-1), counts, max_nnz


def build_pool_matrix(batch, num_graphs, num_nodes):
    onehot = (batch[None, :] == jnp.arange(num_graphs)[:, None]).astype(jnp.float32)
    counts = onehot.sum(axis=1, keepdims=True)
    return onehot / jnp.maximum(counts, 1.0)          # [G, N]


def glorot(key, shape):
    fan_in, fan_out = shape
    limit = jnp.sqrt(6.0 / (fan_in + fan_out))
    return jax.random.uniform(key, shape, jnp.float32, -limit, limit)


def init_params(key, num_features, hidden_dim, num_classes, depth=DEPTH):
    params = []
    in_dim = num_features
    for _ in range(depth):
        key, kw = jax.random.split(key)
        params += [
            glorot(kw, (in_dim, hidden_dim)),                 # GCNConv weight
            jnp.zeros((1, hidden_dim), jnp.float32),          # GCNConv bias
            jnp.ones((1, hidden_dim), jnp.float32),           # BN gamma
            jnp.zeros((1, hidden_dim), jnp.float32),          # BN beta
            jnp.zeros((1, hidden_dim), jnp.float32),          # BN running mean
            jnp.ones((1, hidden_dim), jnp.float32),           # BN running var
        ]
        in_dim = hidden_dim
    key, k1, k2 = jax.random.split(key, 3)
    half = hidden_dim // 2
    params += [
        glorot(k1, (hidden_dim, half)),
        jnp.zeros((1, half), jnp.float32),
        glorot(k2, (half, num_classes)),
        jnp.zeros((1, num_classes), jnp.float32),
    ]
    return params


def gcn_model_forward(x, edge_index, batch, params, num_graphs, num_classes,
                      depth=DEPTH):
    num_nodes = x.shape[0]
    n_pad, tile_i, tile_k = _choose_tiles(num_nodes)
    g_pad = _round_up(num_graphs, 8)

    # Dense normalized adjacency + pooling matrix (sparse scatter bookkeeping in plain JAX).
    a_f32 = _pad2(build_norm_adj(edge_index, num_nodes), n_pad, n_pad)
    a = a_f32.astype(jnp.bfloat16)
    ktab, kcnt, max_nnz = build_block_schedule(a_f32, tile_i, tile_k)
    p = _pad2(build_pool_matrix(batch, num_graphs, num_nodes), g_pad, n_pad)   # f32

    # Node features, lane-padded, streamed as bf16. (Padded rows become relu(b')
    # after layer 1 — harmless: A_hat's and P's padded columns are zero.)
    h = _pad2(x, n_pad, LANE).astype(jnp.bfloat16)

    idx = 0
    for _ in range(depth):
        w, b, gamma, beta, rm, rv = params[idx:idx + 6]
        idx += 6
        # Fold eval-mode BatchNorm + conv bias into the layer weight/bias (kept f32).
        scale = gamma * jax.lax.rsqrt(rv + BN_EPS)                 # (1, H)
        w_f = _pad2(w * scale, LANE, LANE)                         # (128, 128) f32
        b_f = _pad2((b - rm) * scale + beta, 1, LANE)              # (1, 128) f32

        # H = relu((A_hat @ H) @ W' + b')  — fused transform + aggregate.
        h = _gcn_layer(a, h, w_f, b_f, ktab, kcnt, tile_i, tile_k, max_nnz)
        # Dropout(p=0.2): identity in eval mode.

    w1, b1, w2, b2 = params[idx:idx + 4]
    w1p = _pad2(w1, LANE, LANE)
    b1p = _pad2(b1, 1, LANE)
    w2p = _pad2(w2, LANE, LANE)
    b2p = _pad2(b2, 1, LANE)

    out_pad = _head(p, h, w1p, b1p, w2p, b2p, tile_i)              # (G_pad, 128) lane-dense
    return out_pad[:num_graphs, :num_classes]


# ---------------------------------- demo --------------------------------------

if __name__ == "__main__":
    key = jax.random.PRNGKey(0)

    num_features = 8
    hidden_dim = 32
    num_classes = 1
    nodes_per_graph = 96
    num_graphs = 2
    num_nodes = nodes_per_graph * num_graphs

    # Two chain graphs (bidirectional edges).
    edges = []
    for g in range(num_graphs):
        base = g * nodes_per_graph
        for i in range(nodes_per_graph - 1):
            edges.append((base + i, base + i + 1))
            edges.append((base + i + 1, base + i))
    edge_index = jnp.array(edges, dtype=jnp.int32).T                        # [2, E]
    batch = jnp.repeat(jnp.arange(num_graphs, dtype=jnp.int32),
                       nodes_per_graph)                                     # [N]

    key, kx, kp = jax.random.split(key, 3)
    x = jax.random.normal(kx, (num_nodes, num_features), jnp.float32)
    params = init_params(kp, num_features, hidden_dim, num_classes)

    out = gcn_model_forward(x, edge_index, batch, params, num_graphs, num_classes)
    out = jax.block_until_ready(out)
    assert out.shape == (num_graphs, num_classes)
    assert bool(jnp.all(jnp.isfinite(out)))
    print("KERNEL_OK")
</pallas_src>

<mosaic_0001>
module attributes {stable_mosaic.version = 11 : i64} {
  func.func @gcn_layer_kernel(%arg0: i32, %arg1: i32, %arg2: memref<4xi32, #tpu.memory_space<smem>>, %arg3: memref<2xi32, #tpu.memory_space<smem>>, %arg4: memref<128x128xbf16, #tpu.memory_space<vmem>>, %arg5: memref<128x128xbf16, #tpu.memory_space<vmem>>, %arg6: memref<128x128xf32, #tpu.memory_space<vmem>>, %arg7: memref<1x128xf32, #tpu.memory_space<vmem>>, %arg8: memref<128x128xbf16, #tpu.memory_space<vmem>>, %arg9: memref<128x128xf32, #tpu.memory_space<vmem>>) attributes {dimension_semantics = [#tpu.dimension_semantics<parallel>, #tpu.dimension_semantics<arbitrary>], iteration_bounds = array<i64: 2, 2>, scalar_prefetch = 2 : i64, scratch_operands = 1 : i64, tpu.core_type = #tpu.core_type<tc>, window_params = [{transform_indices = @transform_0, window_bounds = array<i64: 128, 128>}, {transform_indices = @transform_1, window_bounds = array<i64: 128, 128>}, {pipeline_mode = #tpu.pipeline_mode<synchronous>, transform_indices = @transform_2, window_bounds = array<i64: 128, 128>}, {pipeline_mode = #tpu.pipeline_mode<synchronous>, transform_indices = @transform_3, window_bounds = array<i64: 1, 128>}, {transform_indices = @transform_4, window_bounds = array<i64: 128, 128>}]} {
    %c0_i32 = arith.constant 0 : i32
    %0 = arith.cmpi eq, %arg1, %c0_i32 : i32
    %1 = arith.extui %0 : i1 to i32
    %c0_i32_0 = arith.constant 0 : i32
    %2 = arith.cmpi ne, %1, %c0_i32_0 : i32
    scf.if %2 {
      %cst = arith.constant 0.000000e+00 : f32
      %11 = vector.broadcast %cst : f32 to vector<128x128xf32>
      %c0 = arith.constant 0 : index
      %c0_3 = arith.constant 0 : index
      %12 = vector.load %arg9[%c0, %c0_3] : memref<128x128xf32, #tpu.memory_space<vmem>>, vector<128x128xf32>
      tpu.vector_store %arg9[%c0, %c0_3], %11 {strides = array<i32>} : memref<128x128xf32, #tpu.memory_space<vmem>>, vector<128x128xf32>,
    } else {
    }
    %3 = arith.index_cast %arg0 : i32 to index
    %4 = memref.load %arg3[%3] : memref<2xi32, #tpu.memory_space<smem>>
    %5 = arith.cmpi slt, %arg1, %4 : i32
    %6 = arith.extui %5 : i1 to i32
    %c0_i32_1 = arith.constant 0 : i32
    %7 = arith.cmpi ne, %6, %c0_i32_1 : i32
    scf.if %7 {
      %c0 = arith.constant 0 : index
      %c0_3 = arith.constant 0 : index
      %11 = vector.load %arg9[%c0, %c0_3] : memref<128x128xf32, #tpu.memory_space<vmem>>, vector<128x128xf32>
      %c0_4 = arith.constant 0 : index
      %c0_5 = arith.constant 0 : index
      %12 = vector.load %arg4[%c0_4, %c0_5] : memref<128x128xbf16, #tpu.memory_space<vmem>>, vector<128x128xbf16>
      %c0_6 = arith.constant 0 : index
      %c0_7 = arith.constant 0 : index
      %13 = vector.load %arg5[%c0_6, %c0_7] : memref<128x128xbf16, #tpu.memory_space<vmem>>, vector<128x128xbf16>
      %cst = arith.constant dense<0.000000e+00> : vector<128x128xf32>
      %14 = tpu.matmul %12, %13, %cst {dimension_numbers = #tpu.dot_dimension_numbers<[1], [0], [0], [1], [0, 0, 1, 1], [], []>} : vector<128x128xbf16>, vector<128x128xbf16>, vector<128x128xf32> -> vector<128x128xf32>
      %15 = arith.addf %11, %14 : vector<128x128xf32>
      %c0_8 = arith.constant 0 : index
      %c0_9 = arith.constant 0 : index
      %16 = vector.load %arg9[%c0_8, %c0_9] : memref<128x128xf32, #tpu.memory_space<vmem>>, vector<128x128xf32>
      tpu.vector_store %arg9[%c0_8, %c0_9], %15 {strides = array<i32>} : memref<128x128xf32, #tpu.memory_space<vmem>>, vector<128x128xf32>,
    } else {
    }
    %c1_i32 = arith.constant 1 : i32
    %8 = arith.cmpi eq, %arg1, %c1_i32 : i32
    %9 = arith.extui %8 : i1 to i32
    %c0_i32_2 = arith.constant 0 : i32
    %10 = arith.cmpi ne, %9, %c0_i32_2 : i32
    scf.if %10 {
      %c0 = arith.constant 0 : index
      %c0_3 = arith.constant 0 : index
      %11 = vector.load %arg9[%c0, %c0_3] : memref<128x128xf32, #tpu.memory_space<vmem>>, vector<128x128xf32>
      %c0_4 = arith.constant 0 : index
      %c0_5 = arith.constant 0 : index
      %12 = vector.load %arg6[%c0_4, %c0_5] : memref<128x128xf32, #tpu.memory_space<vmem>>, vector<128x128xf32>
      %cst = arith.constant dense<0.000000e+00> : vector<128x128xf32>
      %13 = tpu.matmul %11, %12, %cst {dimension_numbers = #tpu.dot_dimension_numbers<[1], [0], [0], [1], [0, 0, 1, 1], [], []>} : vector<128x128xf32>, vector<128x128xf32>, vector<128x128xf32> -> vector<128x128xf32>
      %c0_6 = arith.constant 0 : index
      %c0_7 = arith.constant 0 : index
      %14 = vector.load %arg7[%c0_6, %c0_7] : memref<1x128xf32, #tpu.memory_space<vmem>>, vector<1x128xf32>
      %15 = vector.broadcast %14 : vector<1x128xf32> to vector<128x128xf32>
      %16 = arith.addf %13, %15 : vector<128x128xf32>
      %cst_8 = arith.constant 0.000000e+00 : f32
      %17 = vector.broadcast %cst_8 : f32 to vector<128x128xf32>
      %18 = arith.maximumf %16, %17 : vector<128x128xf32>
      %19 = arith.truncf %18 : vector<128x128xf32> to vector<128x128xbf16>
      %c0_9 = arith.constant 0 : index
      %c0_10 = arith.constant 0 : index
      %20 = vector.load %arg8[%c0_9, %c0_10] : memref<128x128xbf16, #tpu.memory_space<vmem>>, vector<128x128xbf16>
      tpu.vector_store %arg8[%c0_9, %c0_10], %19 {strides = array<i32>} : memref<128x128xbf16, #tpu.memory_space<vmem>>, vector<128x128xbf16>,
    } else {
    }
    return
  }
  func.func @transform_0(%arg0: i32, %arg1: i32, %arg2: memref<4xi32, #tpu.memory_space<smem>>, %arg3: memref<2xi32, #tpu.memory_space<smem>>) -> (i32, i32) {
    %c2_i32 = arith.constant 2 : i32
    %0 = arith.muli %arg0, %c2_i32 : i32
    %1 = arith.addi %0, %arg1 : i32
    %2 = arith.index_cast %1 : i32 to index
    %3 = memref.load %arg2[%2] : memref<4xi32, #tpu.memory_space<smem>>
    %c0_i32 = arith.constant 0 : i32
    return %arg0, %3 : i32, i32
  }
  func.func @transform_1(%arg0: i32, %arg1: i32, %arg2: memref<4xi32, #tpu.memory_space<smem>>, %arg3: memref<2xi32, #tpu.memory_space<smem>>) -> (i32, i32) {
    %c2_i32 = arith.constant 2 : i32
    %0 = arith.muli %arg0, %c2_i32 : i32
    %1 = arith.addi %0, %arg1 : i32
    %2 = arith.index_cast %1 : i32 to index
    %3 = memref.load %arg2[%2] : memref<4xi32, #tpu.memory_space<smem>>
    %c0_i32 = arith.constant 0 : i32
    %c0_i32_0 = arith.constant 0 : i32
    return %3, %c0_i32 : i32, i32
  }
  func.func @transform_2(%arg0: i32, %arg1: i32, %arg2: memref<4xi32, #tpu.memory_space<smem>>, %arg3: memref<2xi32, #tpu.memory_space<smem>>) -> (i32, i32) {
    %c0_i32 = arith.constant 0 : i32
    %c0_i32_0 = arith.constant 0 : i32
    %c0_i32_1 = arith.constant 0 : i32
    return %c0_i32, %c0_i32_0 : i32, i32
  }
  func.func @transform_3(%arg0: i32, %arg1: i32, %arg2: memref<4xi32, #tpu.memory_space<smem>>, %arg3: memref<2xi32, #tpu.memory_space<smem>>) -> (i32, i32) {
    %c0_i32 = arith.constant 0 : i32
    %c0_i32_0 = arith.constant 0 : i32
    %c0_i32_1 = arith.constant 0 : i32
    return %c0_i32, %c0_i32_0 : i32, i32
  }
  func.func @transform_4(%arg0: i32, %arg1: i32, %arg2: memref<4xi32, #tpu.memory_space<smem>>, %arg3: memref<2xi32, #tpu.memory_space<smem>>) -> (i32, i32) {
    %c0_i32 = arith.constant 0 : i32
    %c0_i32_0 = arith.constant 0 : i32
    return %arg0, %c0_i32 : i32, i32
  }
}

</mosaic_0001>

<llo_original>
// kernel: tpu_custom_call.1
$region0: #{tpu_custom_call.1}
  #allocation0 [shape = 'u32[]', space=smem, size = 0x4, offset = 0x4, fixed_abs, tag = 'smem constant byte address 0x4 - core index']
  #allocation1 [shape = 'u32[144,128]{1,0:T(1,128)}', space=vmem, size = 0x12000, scoped, tag = 'internal scratch']
  #allocation2 [shape = 'f32[128,128]{1,0:T(8,128)}', space=vmem, size = 0x10000, scoped, tag = 'scratch operand']
  #allocation3 [shape = 's32[1]{0}', space=sflag, size = 0x4, scoped, tag = 'scoped memory for tpu_custom_call.1']
  #allocation4 [shape = 'u8[512]{0}', space=smem, size = 0x200, scoped, tag = 'prefetched SMEM operand 0']
  #allocation5 [shape = 'u8[512]{0}', space=smem, size = 0x200, scoped, tag = 'prefetched SMEM operand 1']
  %s0 = inlined_call_operand.hbm [shape: s32[4], index: 0, kind: input, shape index: {}]
  %s1 = inlined_call_operand.vmem [shape: s32[2], index: 1, kind: input, shape index: {}]
  %s2 = inlined_call_operand.hbm [shape: bf16[256,256], index: 2, kind: input, shape index: {}]
  %s3 = inlined_call_operand.hbm [shape: bf16[256,128], index: 3, kind: input, shape index: {}]
  %s4 = inlined_call_operand.hbm [shape: f32[128,128], index: 4, kind: input, shape index: {}]
  %s5 = inlined_call_operand.vmem [shape: f32[1,128], index: 5, kind: input, shape index: {}]
  %s6 = inlined_call_operand.hbm [shape: bf16[256,128], index: 6, kind: output, shape index: {}]
  %s7 = sld [smem:[#allocation0]]
  $region73: #{tpu_custom_call.1} parent=0
    _
  %s9 = ssub.s32 1, %s7
  %s10 = scalar_select 0, %s9, %s7
  %12 = dma.hbm_to_smem %s0, 16, [#allocation4], [#allocation3]
  %s13 = sshll.u32 %s1, 4
  %s14 = int_to_ptr.vmem [resolvable:$true] %s13
  %16 = dma.vmem_to_smem %s14, 16, [#allocation5], [#allocation3]
  %17 = dma.done [#allocation3], 32
  %18 = sfence
  $region1: #{tpu_custom_call.1} parent=0
    #allocation6 [shape = 'u8[65536]{0}', space=vmem, size = 0x10000, scoped, tag = 'input window, operand 2']
    #allocation7 [shape = 's32[2]{0}', space=sflag, size = 0x8, scoped, tag = 'scoped memory for tpu_custom_call.1']
    #allocation8 [shape = 's32[2]{0}', space=sflag, size = 0x8, scoped, tag = 'scoped memory for tpu_custom_call.1']
    #allocation9 [shape = 'u8[65536]{0}', space=vmem, size = 0x10000, scoped, tag = 'input window, operand 3']
    #allocation10 [shape = 's32[2]{0}', space=sflag, size = 0x8, scoped, tag = 'scoped memory for tpu_custom_call.1']
    #allocation11 [shape = 'u8[65536]{0}', space=vmem, size = 0x10000, scoped, tag = 'input window, operand 4, single buffered']
    #allocation12 [shape = 'u8[65536]{0}', space=vmem, size = 0x10000, scoped, tag = 'output window, operand 0']
    %19 = vsyncpa [#allocation7], 0
    %s20 = scalar_lea.sflag [#allocation7], 1
    %21 = vsyncpa %s20, 0
    %22 = vsyncpa [#allocation10], 0
    %s23 = scalar_lea.sflag [#allocation10], 1
    %24 = vsyncpa %s23, 0
    %25 = vsyncpa [#allocation8], 0
    %s26 = scalar_lea.sflag [#allocation8], 1
    %27 = vsyncpa %s26, 0
    loop: start=0, step=1, limit=6
    $region2: #{tpu_custom_call.1} parent=1 // loop_pre_header
      _
    $region3: #{tpu_custom_call.1} parent=1 // loop_header
      %s29 = sphi 0, %s33
      %p30 = scmp.ge.s32.totalorder %s29, 6
      %s36 = sphi 0, %s48
      %s37 = sphi 0, %s44
      %s38 = sphi 0, %s36
      %s39 = sphi 0, %s37
      %s40 = sphi 0, %s38
      %s41 = sphi 0, %s39
      %s59 = sphi 0, %s61
      %s62 = sphi 0, %s59
      %s63 = sphi 0, %s62
      %s79 = sphi 0, %s63
      %s91 = sphi 0, %s93
      %s94 = sphi 0, %s91
      %s95 = sphi 0, %s94
      %s111 = sphi 0, %s95
      %s115 = sphi 0, %s115
      %s117 = sphi 0, %s115
      %s118 = sphi 0, %s117
      %s132 = sphi 0, %s118
      %s136 = sphi 0, %s136
      %s138 = sphi 0, %s136
      %s139 = sphi 0, %s138
      %s153 = sphi 0, %s139
      %s159 = sphi 0, %s161
      %s162 = sphi 0, %s159
      %s163 = sphi 0, %s162
      %s179 = sphi 0, %s163
    $region4: #{tpu_custom_call.1} parent=1 // loop_header_branch
      %32 = sbr.rel (%p30) target = $region8
    $region5: #{tpu_custom_call.1} parent=1 // loop_body
      %s34 = ssub.s32 %s29, 1
      %s35 = ssub.s32 %s29, 2
      %s42 = sadd.s32 1, %s37
      %p43 = scmp.ge.s32.totalorder %s42, 2
      %s44 = scalar_select %p43, 0, %s42
      %s45 = sadd.s32 1, %s36
      %s46 = scalar_select %p43, %s45, %s36
      %p47 = scmp.ge.s32.totalorder %s46, 2
      %s48 = scalar_select %p47, 0, %s46
      %s49 = smul.u32 %s36, 2
      %s50 = sadd.s32 %s49, %s37
      %s51 = sld [smem:[#allocation4 + %s50]]
      %s52 = smul.u32 %s48, 2
      %s53 = sadd.s32 %s52, %s44
      %s54 = sld [smem:[#allocation4 + %s53]]
      %s55 = ssub.s32 %s36, %s48
      %s56 = ssub.s32 %s51, %s54
      %s57 = sor.u32 %s55, %s56
      %p58 = scmp.eq.s32.totalorder %s57, 0
      %s60 = sadd.s32 %s59, 1
      %s61 = scalar_select %p58, %s59, %s60
      %p64 = pneg %p58
      %p65 = scmp.eq.s32.totalorder %s29, 3
      %p66 = por %p64, %p65
      %p67 = scmp.ne.s32.totalorder %s59, %s62
      %p68 = scmp.eq.s32.totalorder %s29, 0
      %p69 = por %p67, %p68
      %p70 = scmp.ne.s32.totalorder %s59, %s62
      %p71 = scmp.eq.s32.totalorder %s34, 3
      %p72 = por %p70, %p71
      %p73 = scmp.ne.s32.totalorder %s62, %s63
      %p74 = scmp.eq.s32.totalorder %s34, 0
      %p75 = por %p73, %p74
      %p76 = scmp.ne.s32.totalorder %s62, %s63
      %p77 = scmp.eq.s32.totalorder %s35, 3
      %p78 = por %p76, %p77
      %p80 = scmp.ne.s32.totalorder %s63, %s79
      %p81 = scmp.eq.s32.totalorder %s35, 0
      %p82 = por %p80, %p81
      %s83 = smul.u32 %s36, 2
      %s84 = sadd.s32 %s83, %s37
      %s85 = sld [smem:[#allocation4 + %s84]]
      %s86 = smul.u32 %s48, 2
      %s87 = sadd.s32 %s86, %s44
      %s88 = sld [smem:[#allocation4 + %s87]]
      %s89 = ssub.s32 %s85, %s88
      %p90 = scmp.eq.s32.totalorder %s89, 0
      %s92 = sadd.s32 %s91, 1
      %s93 = scalar_select %p90, %s91, %s92
      %p96 = pneg %p90
      %p97 = scmp.eq.s32.totalorder %s29, 3
      %p98 = por %p96, %p97
      %p99 = scmp.ne.s32.totalorder %s91, %s94
      %p100 = scmp.eq.s32.totalorder %s29, 0
      %p101 = por %p99, %p100
      %p102 = scmp.ne.s32.totalorder %s91, %s94
      %p103 = scmp.eq.s32.totalorder %s34, 3
      %p104 = por %p102, %p103
      %p105 = scmp.ne.s32.totalorder %s94, %s95
      %p106 = scmp.eq.s32.totalorder %s34, 0
      %p107 = por %p105, %p106
      %p108 = scmp.ne.s32.totalorder %s94, %s95
      %p109 = scmp.eq.s32.totalorder %s35, 3
      %p110 = por %p108, %p109
      %p112 = scmp.ne.s32.totalorder %s95, %s111
      %p113 = scmp.eq.s32.totalorder %s35, 0
      %p114 = por %p112, %p113
      %s116 = sadd.s32 %s115, 1
      %p119 = scmp.eq.s32.totalorder %s29, 3
      %p120 = scmp.ne.s32.totalorder %s115, %s117
      %p121 = scmp.eq.s32.totalorder %s29, 0
      %p122 = por %p120, %p121
      %p123 = scmp.ne.s32.totalorder %s115, %s117
      %p124 = scmp.eq.s32.totalorder %s34, 3
      %p125 = por %p123, %p124
      %p126 = scmp.ne.s32.totalorder %s117, %s118
      %p127 = scmp.eq.s32.totalorder %s34, 0
      %p128 = por %p126, %p127
      %p129 = scmp.ne.s32.totalorder %s117, %s118
      %p130 = scmp.eq.s32.totalorder %s35, 3
      %p131 = por %p129, %p130
      %p133 = scmp.ne.s32.totalorder %s118, %s132
      %p134 = scmp.eq.s32.totalorder %s35, 0
      %p135 = por %p133, %p134
      %s137 = sadd.s32 %s136, 1
      %p140 = scmp.eq.s32.totalorder %s29, 3
      %p141 = scmp.ne.s32.totalorder %s136, %s138
      %p142 = scmp.eq.s32.totalorder %s29, 0
      %p143 = por %p141, %p142
      %p144 = scmp.ne.s32.totalorder %s136, %s138
      %p145 = scmp.eq.s32.totalorder %s34, 3
      %p146 = por %p144, %p145
      %p147 = scmp.ne.s32.totalorder %s138, %s139
      %p148 = scmp.eq.s32.totalorder %s34, 0
      %p149 = por %p147, %p148
      %p150 = scmp.ne.s32.totalorder %s138, %s139
      %p151 = scmp.eq.s32.totalorder %s35, 3
      %p152 = por %p150, %p151
      %p154 = scmp.ne.s32.totalorder %s139, %s153
      %p155 = scmp.eq.s32.totalorder %s35, 0
      %p156 = por %p154, %p155
      %s157 = ssub.s32 %s36, %s48
      %p158 = scmp.eq.s32.totalorder %s157, 0
      %s160 = sadd.s32 %s159, 1
      %s161 = scalar_select %p158, %s159, %s160
      %p164 = pneg %p158
      %p165 = scmp.eq.s32.totalorder %s29, 3
      %p166 = por %p164, %p165
      %p167 = scmp.ne.s32.totalorder %s159, %s162
      %p168 = scmp.eq.s32.totalorder %s29, 0
      %p169 = por %p167, %p168
      %p170 = scmp.ne.s32.totalorder %s159, %s162
      %p171 = scmp.eq.s32.totalorder %s34, 3
      %p172 = por %p170, %p171
      %p173 = scmp.ne.s32.totalorder %s162, %s163
      %p174 = scmp.eq.s32.totalorder %s34, 0
      %p175 = por %p173, %p174
      %p176 = scmp.ne.s32.totalorder %s162, %s163
      %p177 = scmp.eq.s32.totalorder %s35, 3
      %p178 = por %p176, %p177
      %p180 = scmp.ne.s32.totalorder %s163, %s179
      %p181 = scmp.eq.s32.totalorder %s35, 0
      %p182 = por %p180, %p181
      %p183 = scmp.le.s32.totalorder 1, %s29
      %p184 = scmp.lt.s32.totalorder %s29, 5
      %p185 = pnand %p183, %p184
      %p186 = pneg %p185
      // Predicated region
      $region9: #{tpu_custom_call.1} parent=5 // pred_check
        _
      $region10: #{tpu_custom_call.1} parent=5 // pred_check_branch
        %188 = sbr.rel (%p185) target = $region12
      $region11: #{tpu_custom_call.1} parent=5 // pred_region
        %s189 = ssub.s32 %s29, 1
        // Predicated region
        $region13: #{tpu_custom_call.1} parent=11 // pred_check
          %p190 = pneg %p128
        $region14: #{tpu_custom_call.1} parent=11 // pred_check_branch
          %192 = sbr.rel (%p190) target = $region16
        $region15: #{tpu_custom_call.1} parent=11 // pred_region
          %s194 = ssub.s32 2048, 2048
          %195 = vsyncadd [#allocation10], %s194
          %s196 = sshll.u32 [#allocation11], 4
          %s197 = int_to_ptr.vmem [resolvable:$true] %s196
          %202 = dma.hbm_to_vmem [thread:$0]  %s4, 2048, %s197, [#allocation10], 128, 128, 8
        $region16: #{tpu_custom_call.1} parent=11 // pred_fallthru
          _
        // Predicated region
        $region17: #{tpu_custom_call.1} parent=11 // pred_check
          %p203 = pneg %p149
        $region18: #{tpu_custom_call.1} parent=11 // pred_check_branch
          %205 = sbr.rel (%p203) target = $region20
        $region19: #{tpu_custom_call.1} parent=11 // pred_region
          _
        $region20: #{tpu_custom_call.1} parent=11 // pred_fallthru
          _
      $region12: #{tpu_custom_call.1} parent=5 // pred_fallthru
        _
      %p206 = scmp.lt.s32.totalorder %s29, 4
      // Predicated region
      $region21: #{tpu_custom_call.1} parent=5 // pred_check
        %p207 = pneg %p206
      $region22: #{tpu_custom_call.1} parent=5 // pred_check_branch
        %209 = sbr.rel (%p207) target = $region24
      $region23: #{tpu_custom_call.1} parent=5 // pred_region
        // Predicated region
        $region25: #{tpu_custom_call.1} parent=23 // pred_check
          %p210 = pneg %p69
        $region26: #{tpu_custom_call.1} parent=23 // pred_check_branch
          %212 = sbr.rel (%p210) target = $region28
        $region27: #{tpu_custom_call.1} parent=23 // pred_region
          %s213 = sand.u32 %s59, 1
          %s214 = scalar_lea.sflag [#allocation7], %s213
          %s215 = sand.u32 %s59, 1
          %s216 = smul.addr %s215, 64
          %s217 = scalar_lea.vmem [#allocation6], %s216
          %s218 = smul.u32 %s36, 2
          %s219 = sadd.s32 %s218, %s37
          %s220 = sld [smem:[#allocation4 + %s219]]
          %s221 = smul.u32 16, %s36
          %s223 = ssub.s32 1024, 1024
          %224 = vsyncadd %s214, %s223
          %s225 = smul.addr %s221, 2
          %s226 = sadd.s32 %s220, %s225
          %s227 = smul.addr %s226, 64
          %s228 = scalar_lea.hbm %s2, %s227
          %s229 = sshll.u32 %s217, 4
          %s230 = int_to_ptr.vmem [resolvable:$true] %s229
          %235 = dma.hbm_to_vmem [thread:$0]  %s228, 1024, %s230, %s214, 128, 64, 4
        $region28: #{tpu_custom_call.1} parent=23 // pred_fallthru
          _
        // Predicated region
        $region29: #{tpu_custom_call.1} parent=23 // pred_check
          %p236 = pneg %p101
        $region30: #{tpu_custom_call.1} parent=23 // pred_check_branch
          %238 = sbr.rel (%p236) target = $region32
        $region31: #{tpu_custom_call.1} parent=23 // pred_region
          %s239 = sand.u32 %s29, 1
          %s240 = scalar_lea.sflag [#allocation10], %s239
          %s241 = sand.u32 %s91, 1
          %s242 = smul.addr %s241, 64
          %s243 = scalar_lea.vmem [#allocation9], %s242
          %s244 = smul.u32 %s36, 2
          %s245 = sadd.s32 %s244, %s37
          %s246 = sld [smem:[#allocation4 + %s245]]
          %s247 = smul.u32 16, %s246
          %s249 = ssub.s32 1024, 1024
          %250 = vsyncadd %s240, %s249
          %s251 = smul.addr %s247, 64
          %s252 = scalar_lea.hbm %s3, %s251
          %s253 = sshll.u32 %s243, 4
          %s254 = int_to_ptr.vmem [resolvable:$true] %s253
          %259 = dma.hbm_to_vmem [thread:$0]  %s252, 1024, %s254, %s240, 64, 64, 4
        $region32: #{tpu_custom_call.1} parent=23 // pred_fallthru
          _
      $region24: #{tpu_custom_call.1} parent=5 // pred_fallthru
        _
      %p260 = scmp.le.s32.totalorder 1, %s29
      %p261 = scmp.lt.s32.totalorder %s29, 5
      %p262 = pnand %p260, %p261
      %p263 = pneg %p262
      // Predicated region
      $region33: #{tpu_custom_call.1} parent=5 // pred_check
        _
      $region34: #{tpu_custom_call.1} parent=5 // pred_check_branch
        %265 = sbr.rel (%p262) target = $region36
      $region35: #{tpu_custom_call.1} parent=5 // pred_region
        %s266 = ssub.s32 %s29, 1
        %s267 = sand.u32 %s62, 1
        %s268 = scalar_lea.sflag [#allocation7], %s267
        %s269 = sand.u32 %s62, 1
        %s270 = smul.addr %s269, 64
        %s271 = scalar_lea.vmem [#allocation6], %s270
        // Predicated region
        $region37: #{tpu_custom_call.1} parent=35 // pred_check
          %p272 = pneg %p75
        $region38: #{tpu_custom_call.1} parent=35 // pred_check_branch
          %274 = sbr.rel (%p272) target = $region40
        $region39: #{tpu_custom_call.1} parent=35 // pred_region
          %275 = dma.done %s268, 1024
        $region40: #{tpu_custom_call.1} parent=35 // pred_fallthru
          _
        %s276 = sand.u32 %s34, 1
        %s277 = scalar_lea.sflag [#allocation10], %s276
        %s278 = sand.u32 %s94, 1
        %s279 = smul.addr %s278, 64
        %s280 = scalar_lea.vmem [#allocation9], %s279
        // Predicated region
        $region41: #{tpu_custom_call.1} parent=35 // pred_check
          %p281 = pneg %p107
        $region42: #{tpu_custom_call.1} parent=35 // pred_check_branch
          %283 = sbr.rel (%p281) target = $region44
        $region43: #{tpu_custom_call.1} parent=35 // pred_region
          %284 = dma.done %s277, 1024
        $region44: #{tpu_custom_call.1} parent=35 // pred_fallthru
          _
        // Predicated region
        $region45: #{tpu_custom_call.1} parent=35 // pred_check
          %p285 = pneg %p128
        $region46: #{tpu_custom_call.1} parent=35 // pred_check_branch
          %287 = sbr.rel (%p285) target = $region48
        $region47: #{tpu_custom_call.1} parent=35 // pred_region
          %288 = dma.done [#allocation10], 2048
        $region48: #{tpu_custom_call.1} parent=35 // pred_fallthru
          _
        %s289 = sand.u32 %s62, 1
        %s290 = scalar_lea.sflag [#allocation7], %s289
        %s291 = sand.u32 %s62, 1
        %s292 = smul.addr %s291, 64
        %s293 = scalar_lea.vmem [#allocation6], %s292
        %p294 = pneg %p75
        %p295 = pneg %p72
        %s296 = sand.u32 %s34, 1
        %s297 = scalar_lea.sflag [#allocation10], %s296
        %s298 = sand.u32 %s94, 1
        %s299 = smul.addr %s298, 64
        %s300 = scalar_lea.vmem [#allocation9], %s299
        %p301 = pneg %p107
        %p302 = pneg %p104
        %p303 = pneg %p128
        %p304 = pneg %p125
        %p305 = pneg %p149
        %p306 = pneg %p146
        %p307 = pneg %p175
        %p308 = pneg %p172
        %s309 = sand.u32 %s162, 1
        %s310 = scalar_lea.sflag [#allocation8], %s309
        %s311 = sand.u32 %s162, 1
        %s312 = smul.addr %s311, 64
        %s313 = scalar_lea.vmem [#allocation12], %s312
        %s314 = smul.u32 %s38, 2
        %s315 = sadd.s32 %s314, %s39
        %s316 = sld [smem:[#allocation4 + %s315]]
        %s317 = smul.u32 16, %s38
        %s318 = smul.u32 %s38, 2
        %s319 = sadd.s32 %s318, %s39
        %s320 = sld [smem:[#allocation4 + %s319]]
        %s321 = smul.u32 16, %s320
        %s322 = smul.u32 16, %s38
        %p324 = scmp.eq.s32.totalorder %s39, 0
        // Predicated region
        $region49: #{tpu_custom_call.1} parent=35 // pred_check
          %p325 = pneg %p324
        $region50: #{tpu_custom_call.1} parent=35 // pred_check_branch
          %327 = sbr.rel (%p325) target = $region52
        $region51: #{tpu_custom_call.1} parent=35 // pred_region
          %328 = vst [vmem:[#allocation2] sm:$0xff] 0.0
          %329 = vst [vmem:[#allocation2 + $0x8] sm:$0xff] 0.0
          %330 = vst [vmem:[#allocation2 + $0x10] sm:$0xff] 0.0
          %331 = vst [vmem:[#allocation2 + $0x18] sm:$0xff] 0.0
          %332 = vst [vmem:[#allocation2 + $0x20] sm:$0xff] 0.0
          %333 = vst [vmem:[#allocation2 + $0x28] sm:$0xff] 0.0
          %334 = vst [vmem:[#allocation2 + $0x30] sm:$0xff] 0.0
          %335 = vst [vmem:[#allocation2 + $0x38] sm:$0xff] 0.0
          %336 = vst [vmem:[#allocation2 + $0x40] sm:$0xff] 0.0
          %337 = vst [vmem:[#allocation2 + $0x48] sm:$0xff] 0.0
          %338 = vst [vmem:[#allocation2 + $0x50] sm:$0xff] 0.0
          %339 = vst [vmem:[#allocation2 + $0x58] sm:$0xff] 0.0
          %340 = vst [vmem:[#allocation2 + $0x60] sm:$0xff] 0.0
          %341 = vst [vmem:[#allocation2 + $0x68] sm:$0xff] 0.0
          %342 = vst [vmem:[#allocation2 + $0x70] sm:$0xff] 0.0
          %343 = vst [vmem:[#allocation2 + $0x78] sm:$0xff] 0.0
        $region52: #{tpu_custom_call.1} parent=35 // pred_fallthru
          _
        %s344 = sld [smem:[#allocation5 + %s38]]
        %p345 = scmp.lt.s32.totalorder %s39, %s344
        // Predicated region
        $region53: #{tpu_custom_call.1} parent=35 // pred_check
          %p346 = pneg %p345
        $region54: #{tpu_custom_call.1} parent=35 // pred_check_branch
          %348 = sbr.rel (%p346) target = $region56
        $region55: #{tpu_custom_call.1} parent=35 // pred_region
          %v349 = vld [vmem:[#allocation2] sm:$0xff]
          %v350 = vld [vmem:[#allocation2 + $0x8] sm:$0xff]
          %v351 = vld [vmem:[#allocation2 + $0x10] sm:$0xff]
          %v352 = vld [vmem:[#allocation2 + $0x18] sm:$0xff]
          %v353 = vld [vmem:[#allocation2 + $0x20] sm:$0xff]
          %v354 = vld [vmem:[#allocation2 + $0x28] sm:$0xff]
          %v355 = vld [vmem:[#allocation2 + $0x30] sm:$0xff]
          %v356 = vld [vmem:[#allocation2 + $0x38] sm:$0xff]
          %v357 = vld [vmem:[#allocation2 + $0x40] sm:$0xff]
          %v358 = vld [vmem:[#allocation2 + $0x48] sm:$0xff]
          %v359 = vld [vmem:[#allocation2 + $0x50] sm:$0xff]
          %v360 = vld [vmem:[#allocation2 + $0x58] sm:$0xff]
          %v361 = vld [vmem:[#allocation2 + $0x60] sm:$0xff]
          %v362 = vld [vmem:[#allocation2 + $0x68] sm:$0xff]
          %v363 = vld [vmem:[#allocation2 + $0x70] sm:$0xff]
          %v364 = vld [vmem:[#allocation2 + $0x78] sm:$0xff]
          %v365 = vld [vmem:[%s271] sm:$0xf]
          %v366 = vld [vmem:[%s271 + $0x4] sm:$0xf]
          %v367 = vld [vmem:[%s271 + $0x8] sm:$0xf]
          %v368 = vld [vmem:[%s271 + $0xc] sm:$0xf]
          %v369 = vld [vmem:[%s271 + $0x10] sm:$0xf]
          %v370 = vld [vmem:[%s271 + $0x14] sm:$0xf]
          %v371 = vld [vmem:[%s271 + $0x18] sm:$0xf]
          %v372 = vld [vmem:[%s271 + $0x1c] sm:$0xf]
          %v373 = vld [vmem:[%s271 + $0x20] sm:$0xf]
          %v374 = vld [vmem:[%s271 + $0x24] sm:$0xf]
          %v375 = vld [vmem:[%s271 + $0x28] sm:$0xf]
          %v376 = vld [vmem:[%s271 + $0x2c] sm:$0xf]
          %v377 = vld [vmem:[%s271 + $0x30] sm:$0xf]
          %v378 = vld [vmem:[%s271 + $0x34] sm:$0xf]
          %v379 = vld [vmem:[%s271 + $0x38] sm:$0xf]
          %v380 = vld [vmem:[%s271 + $0x3c] sm:$0xf]
          %v381 = vld [vmem:[%s280] sm:$0xf]
          %v382 = vld [vmem:[%s280 + $0x4] sm:$0xf]
          %v383 = vld [vmem:[%s280 + $0x8] sm:$0xf]
          %v384 = vld [vmem:[%s280 + $0xc] sm:$0xf]
          %v385 = vld [vmem:[%s280 + $0x10] sm:$0xf]
          %v386 = vld [vmem:[%s280 + $0x14] sm:$0xf]
          %v387 = vld [vmem:[%s280 + $0x18] sm:$0xf]
          %v388 = vld [vmem:[%s280 + $0x1c] sm:$0xf]
          %v389 = vld [vmem:[%s280 + $0x20] sm:$0xf]
          %v390 = vld [vmem:[%s280 + $0x24] sm:$0xf]
          %v391 = vld [vmem:[%s280 + $0x28] sm:$0xf]
          %v392 = vld [vmem:[%s280 + $0x2c] sm:$0xf]
          %v393 = vld [vmem:[%s280 + $0x30] sm:$0xf]
          %v394 = vld [vmem:[%s280 + $0x34] sm:$0xf]
          %v395 = vld [vmem:[%s280 + $0x38] sm:$0xf]
          %v396 = vld [vmem:[%s280 + $0x3c] sm:$0xf]
          %v413 = vunpack.c.l.b16 %v365
          %v414 = vunpack.c.l.b16 %v366
          %v415 = vunpack.c.l.b16 %v367
          %v416 = vunpack.c.l.b16 %v368
          %v417 = vunpack.c.l.b16 %v369
          %v418 = vunpack.c.l.b16 %v370
          %v419 = vunpack.c.l.b16 %v371
          %v420 = vunpack.c.l.b16 %v372
          %v421 = vunpack.c.l.b16 %v373
          %v422 = vunpack.c.l.b16 %v374
          %v423 = vunpack.c.l.b16 %v375
          %v424 = vunpack.c.l.b16 %v376
          %v425 = vunpack.c.l.b16 %v377
          %v426 = vunpack.c.l.b16 %v378
          %v427 = vunpack.c.l.b16 %v379
          %v428 = vunpack.c.l.b16 %v380
          %v429 = vpack.c.b16 %v414, %v413
          %v430 = vpack.c.b16 %v416, %v415
          %v431 = vpack.c.b16 %v418, %v417
          %v432 = vpack.c.b16 %v420, %v419
          %v433 = vpack.c.b16 %v422, %v421
          %v434 = vpack.c.b16 %v424, %v423
          %v435 = vpack.c.b16 %v426, %v425
          %v436 = vpack.c.b16 %v428, %v427
          %v461 = vunpack.c.l.b16 %v381
          %v462 = vunpack.c.l.b16 %v382
          %v463 = vunpack.c.l.b16 %v383
          %v464 = vunpack.c.l.b16 %v384
          %v465 = vunpack.c.l.b16 %v385
          %v466 = vunpack.c.l.b16 %v386
          %v467 = vunpack.c.l.b16 %v387
          %v468 = vunpack.c.l.b16 %v388
          %v469 = vunpack.c.l.b16 %v389
          %v470 = vunpack.c.l.b16 %v390
          %v471 = vunpack.c.l.b16 %v391
          %v472 = vunpack.c.l.b16 %v392
          %v473 = vunpack.c.l.b16 %v393
          %v474 = vunpack.c.l.b16 %v394
          %v475 = vunpack.c.l.b16 %v395
          %v476 = vunpack.c.l.b16 %v396
          %v477 = vpack.c.b16 %v462, %v461
          %v478 = vpack.c.b16 %v464, %v463
          %v479 = vpack.c.b16 %v466, %v465
          %v480 = vpack.c.b16 %v468, %v467
          %v481 = vpack.c.b16 %v470, %v469
          %v482 = vpack.c.b16 %v472, %v471
          %v483 = vpack.c.b16 %v474, %v473
          %v484 = vpack.c.b16 %v476, %v475
          %493 = vmatprep.subr.bf16.mxu0 0
          %494 = vmatpush1.bf16.msra.mxu0 %v484
          %495 = vmatprep.subr.bf16.mxu0 0
          %496 = vmatpush1.bf16.msra.mxu0 %v483
          %497 = vmatprep.subr.bf16.mxu0 0
          %498 = vmatpush1.bf16.msra.mxu0 %v482
          %499 = vmatprep.subr.bf16.mxu0 0
          %500 = vmatpush1.bf16.msra.mxu0 %v481
          %501 = vmatprep.subr.bf16.mxu0 0
          %502 = vmatpush1.bf16.msra.mxu0 %v480
          %503 = vmatprep.subr.bf16.mxu0 0
          %504 = vmatpush1.bf16.msra.mxu0 %v479
          %505 = vmatprep.subr.bf16.mxu0 0
          %506 = vmatpush1.bf16.msra.mxu0 %v478
          %507 = vmatprep.subr.bf16.mxu0 0
          %508 = vmatpush1.bf16.msra.mxu0 %v477
          %509 = vmatprep.subr.bf16.mxu0 0
          %510 = vmatpush2.bf16.msra.mxu0 0
          %511 = vmatprep.subr.bf16.mxu0 0
          %512 = vmatpush2.bf16.msra.mxu0 0
          %513 = vmatprep.subr.bf16.mxu0 0
          %514 = vmatpush2.bf16.msra.mxu0 0
          %515 = vmatprep.subr.bf16.mxu0 0
          %516 = vmatpush2.bf16.msra.mxu0 0
          %517 = vmatprep.subr.bf16.mxu0 0
          %518 = vmatpush2.bf16.msra.mxu0 0
          %519 = vmatprep.subr.bf16.mxu0 0
          %520 = vmatpush2.bf16.msra.mxu0 0
          %521 = vmatprep.subr.bf16.mxu0 0
          %522 = vmatpush2.bf16.msra.mxu0 0
          %523 = vmatprep.subr.bf16.mxu0 0
          %524 = vmatpush2.bf16.msra.mxu0 0
          %525 = vmatprep.mubr.bf16.mxu0 0
          %526 = vmatmul.mubr.bf16.gmra.mxu0 %v429
          %v527 = vpop.f32.mrf.mxu0
          %v528 = vadd.f32 0.0, %v527
          %v529 = vpop.f32.mrf.mxu0
          %v530 = vpop.f32.mrf.mxu0
          %v531 = vadd.f32 0.0, %v530
          %v532 = vpop.f32.mrf.mxu0
          %533 = vmatprep.mubr.bf16.mxu0 0
          %534 = vmatmul.mubr.bf16.gmra.mxu0 %v430
          %v535 = vpop.f32.mrf.mxu0
          %v536 = vadd.f32 0.0, %v535
          %v537 = vpop.f32.mrf.mxu0
          %v538 = vpop.f32.mrf.mxu0
          %v539 = vadd.f32 0.0, %v538
          %v540 = vpop.f32.mrf.mxu0
          %541 = vmatprep.mubr.bf16.mxu0 0
          %542 = vmatmul.mubr.bf16.gmra.mxu0 %v431
          %v543 = vpop.f32.mrf.mxu0
          %v544 = vadd.f32 0.0, %v543
          %v545 = vpop.f32.mrf.mxu0
          %v546 = vpop.f32.mrf.mxu0
          %v547 = vadd.f32 0.0, %v546
          %v548 = vpop.f32.mrf.mxu0
          %549 = vmatprep.mubr.bf16.mxu0 0
          %550 = vmatmul.mubr.bf16.gmra.mxu0 %v432
          %v551 = vpop.f32.mrf.mxu0
          %v552 = vadd.f32 0.0, %v551
          %v553 = vpop.f32.mrf.mxu0
          %v554 = vpop.f32.mrf.mxu0
          %v555 = vadd.f32 0.0, %v554
          %v556 = vpop.f32.mrf.mxu0
          %557 = vmatprep.mubr.bf16.mxu0 0
          %558 = vmatmul.mubr.bf16.gmra.mxu0 %v433
          %v559 = vpop.f32.mrf.mxu0
          %v560 = vadd.f32 0.0, %v559
          %v561 = vpop.f32.mrf.mxu0
          %v562 = vpop.f32.mrf.mxu0
          %v563 = vadd.f32 0.0, %v562
          %v564 = vpop.f32.mrf.mxu0
          %565 = vmatprep.mubr.bf16.mxu0 0
          %566 = vmatmul.mubr.bf16.gmra.mxu0 %v434
          %v567 = vpop.f32.mrf.mxu0
          %v568 = vadd.f32 0.0, %v567
          %v569 = vpop.f32.mrf.mxu0
          %v570 = vpop.f32.mrf.mxu0
          %v571 = vadd.f32 0.0, %v570
          %v572 = vpop.f32.mrf.mxu0
          %573 = vmatprep.mubr.bf16.mxu0 0
          %574 = vmatmul.mubr.bf16.gmra.mxu0 %v435
          %v575 = vpop.f32.mrf.mxu0
          %v576 = vadd.f32 0.0, %v575
          %v577 = vpop.f32.mrf.mxu0
          %v578 = vpop.f32.mrf.mxu0
          %v579 = vadd.f32 0.0, %v578
          %v580 = vpop.f32.mrf.mxu0
          %581 = vmatprep.mubr.bf16.mxu0 0
          %582 = vmatmul.mubr.bf16.gmra.mxu0 %v436
          %v583 = vpop.f32.mrf.mxu0
          %v584 = vadd.f32 0.0, %v583
          %v585 = vpop.f32.mrf.mxu0
          %v586 = vpop.f32.mrf.mxu0
          %v587 = vadd.f32 0.0, %v586
          %v588 = vpop.f32.mrf.mxu0
          %589 = vdwg.mxu0
          %v590 = vadd.f32 %v349, %v528
          %v591 = vadd.f32 %v350, %v531
          %v592 = vadd.f32 %v351, %v536
          %v593 = vadd.f32 %v352, %v539
          %v594 = vadd.f32 %v353, %v544
          %v595 = vadd.f32 %v354, %v547
          %v596 = vadd.f32 %v355, %v552
          %v597 = vadd.f32 %v356, %v555
          %v598 = vadd.f32 %v357, %v560
          %v599 = vadd.f32 %v358, %v563
          %v600 = vadd.f32 %v359, %v568
          %v601 = vadd.f32 %v360, %v571
          %v602 = vadd.f32 %v361, %v576
          %v603 = vadd.f32 %v362, %v579
          %v604 = vadd.f32 %v363, %v584
          %v605 = vadd.f32 %v364, %v587
          %606 = vst [vmem:[#allocation2] sm:$0xff] %v590
          %607 = vst [vmem:[#allocation2 + $0x8] sm:$0xff] %v591
          %608 = vst [vmem:[#allocation2 + $0x10] sm:$0xff] %v592
          %609 = vst [vmem:[#allocation2 + $0x18] sm:$0xff] %v593
          %610 = vst [vmem:[#allocation2 + $0x20] sm:$0xff] %v594
          %611 = vst [vmem:[#allocation2 + $0x28] sm:$0xff] %v595
          %612 = vst [vmem:[#allocation2 + $0x30] sm:$0xff] %v596
          %613 = vst [vmem:[#allocation2 + $0x38] sm:$0xff] %v597
          %614 = vst [vmem:[#allocation2 + $0x40] sm:$0xff] %v598
          %615 = vst [vmem:[#allocation2 + $0x48] sm:$0xff] %v599
          %616 = vst [vmem:[#allocation2 + $0x50] sm:$0xff] %v600
          %617 = vst [vmem:[#allocation2 + $0x58] sm:$0xff] %v601
          %618 = vst [vmem:[#allocation2 + $0x60] sm:$0xff] %v602
          %619 = vst [vmem:[#allocation2 + $0x68] sm:$0xff] %v603
          %620 = vst [vmem:[#allocation2 + $0x70] sm:$0xff] %v604
          %621 = vst [vmem:[#allocation2 + $0x78] sm:$0xff] %v605
        $region56: #{tpu_custom_call.1} parent=35 // pred_fallthru
          _
        %p622 = scmp.eq.s32.totalorder %s39, 1
        // Predicated region
        $region57: #{tpu_custom_call.1} parent=35 // pred_check
          %p623 = pneg %p622
        $region58: #{tpu_custom_call.1} parent=35 // pred_check_branch
          %625 = sbr.rel (%p623) target = $region60
        $region59: #{tpu_custom_call.1} parent=35 // pred_region
          %v626 = vld [vmem:[#allocation2] sm:$0xff]
          %v627 = vld [vmem:[#allocation2 + $0x8] sm:$0xff]
          %v628 = vld [vmem:[#allocation2 + $0x10] sm:$0xff]
          %v629 = vld [vmem:[#allocation2 + $0x18] sm:$0xff]
          %v630 = vld [vmem:[#allocation2 + $0x20] sm:$0xff]
          %v631 = vld [vmem:[#allocation2 + $0x28] sm:$0xff]
          %v632 = vld [vmem:[#allocation2 + $0x30] sm:$0xff]
          %v633 = vld [vmem:[#allocation2 + $0x38] sm:$0xff]
          %v634 = vld [vmem:[#allocation2 + $0x40] sm:$0xff]
          %v635 = vld [vmem:[#allocation2 + $0x48] sm:$0xff]
          %v636 = vld [vmem:[#allocation2 + $0x50] sm:$0xff]
          %v637 = vld [vmem:[#allocation2 + $0x58] sm:$0xff]
          %v638 = vld [vmem:[#allocation2 + $0x60] sm:$0xff]
          %v639 = vld [vmem:[#allocation2 + $0x68] sm:$0xff]
          %v640 = vld [vmem:[#allocation2 + $0x70] sm:$0xff]
          %v641 = vld [vmem:[#allocation2 + $0x78] sm:$0xff]
          %v642 = vld [vmem:[#allocation11] sm:$0xff]
          %v643 = vld [vmem:[#allocation11 + $0x8] sm:$0xff]
          %v644 = vld [vmem:[#allocation11 + $0x10] sm:$0xff]
          %v645 = vld [vmem:[#allocation11 + $0x18] sm:$0xff]
          %v646 = vld [vmem:[#allocation11 + $0x20] sm:$0xff]
          %v647 = vld [vmem:[#allocation11 + $0x28] sm:$0xff]
          %v648 = vld [vmem:[#allocation11 + $0x30] sm:$0xff]
          %v649 = vld [vmem:[#allocation11 + $0x38] sm:$0xff]
          %v650 = vld [vmem:[#allocation11 + $0x40] sm:$0xff]
          %v651 = vld [vmem:[#allocation11 + $0x48] sm:$0xff]
          %v652 = vld [vmem:[#allocation11 + $0x50] sm:$0xff]
          %v653 = vld [vmem:[#allocation11 + $0x58] sm:$0xff]
          %v654 = vld [vmem:[#allocation11 + $0x60] sm:$0xff]
          %v655 = vld [vmem:[#allocation11 + $0x68] sm:$0xff]
          %v656 = vld [vmem:[#allocation11 + $0x70] sm:$0xff]
          %v657 = vld [vmem:[#allocation11 + $0x78] sm:$0xff]
          %v658 = vld [vmem:[%s5] sm:$0x1]
          %v660 = vlaneseq
          %v661 = vshrl.u32 %v660, 7
          %v662 = vsub.s32 0, %v661
          %v663 = vrot.slane %v658, %v662
          %665 = vmatprep.subr.mxu0 0.0
          %666 = vmatpush1.msra.mxu0 %v657
          %667 = vmatprep.subr.mxu0 0.0
          %668 = vmatpush1.msra.mxu0 %v656
          %669 = vmatprep.subr.mxu0 0.0
          %670 = vmatpush1.msra.mxu0 %v655
          %671 = vmatprep.subr.mxu0 0.0
          %672 = vmatpush1.msra.mxu0 %v654
          %673 = vmatprep.subr.mxu0 0.0
          %674 = vmatpush1.msra.mxu0 %v653
          %675 = vmatprep.subr.mxu0 0.0
          %676 = vmatpush1.msra.mxu0 %v652
          %677 = vmatprep.subr.mxu0 0.0
          %678 = vmatpush1.msra.mxu0 %v651
          %679 = vmatprep.subr.mxu0 0.0
          %680 = vmatpush1.msra.mxu0 %v650
          %681 = vmatprep.subr.mxu0 0.0
          %682 = vmatpush1.msra.mxu0 %v649
          %683 = vmatprep.subr.mxu0 0.0
          %684 = vmatpush1.msra.mxu0 %v648
          %685 = vmatprep.subr.mxu0 0.0
          %686 = vmatpush1.msra.mxu0 %v647
          %687 = vmatprep.subr.mxu0 0.0
          %688 = vmatpush1.msra.mxu0 %v646
          %689 = vmatprep.subr.mxu0 0.0
          %690 = vmatpush1.msra.mxu0 %v645
          %691 = vmatprep.subr.mxu0 0.0
          %692 = vmatpush1.msra.mxu0 %v644
          %693 = vmatprep.subr.mxu0 0.0
          %694 = vmatpush1.msra.mxu0 %v643
          %695 = vmatprep.subr.mxu0 0.0
          %696 = vmatpush1.msra.mxu0 %v642
          %697 = vmatprep.subr.mxu0 0.0
          %698 = vmatpush2.msra.mxu0 0.0
          %699 = vmatprep.subr.mxu0 0.0
          %700 = vmatpush2.msra.mxu0 0.0
          %701 = vmatprep.subr.mxu0 0.0
          %702 = vmatpush2.msra.mxu0 0.0
          %703 = vmatprep.subr.mxu0 0.0
          %704 = vmatpush2.msra.mxu0 0.0
          %705 = vmatprep.subr.mxu0 0.0
          %706 = vmatpush2.msra.mxu0 0.0
          %707 = vmatprep.subr.mxu0 0.0
          %708 = vmatpush2.msra.mxu0 0.0
          %709 = vmatprep.subr.mxu0 0.0
          %710 = vmatpush2.msra.mxu0 0.0
          %711 = vmatprep.subr.mxu0 0.0
          %712 = vmatpush2.msra.mxu0 0.0
          %713 = vmatprep.subr.mxu0 0.0
          %714 = vmatpush2.msra.mxu0 0.0
          %715 = vmatprep.subr.mxu0 0.0
          %716 = vmatpush2.msra.mxu0 0.0
          %717 = vmatprep.subr.mxu0 0.0
          %718 = vmatpush2.msra.mxu0 0.0
          %719 = vmatprep.subr.mxu0 0.0
          %720 = vmatpush2.msra.mxu0 0.0
          %721 = vmatprep.subr.mxu0 0.0
          %722 = vmatpush2.msra.mxu0 0.0
          %723 = vmatprep.subr.mxu0 0.0
          %724 = vmatpush2.msra.mxu0 0.0
          %725 = vmatprep.subr.mxu0 0.0
          %726 = vmatpush2.msra.mxu0 0.0
          %727 = vmatprep.subr.mxu0 0.0
          %728 = vmatpush2.msra.mxu0 0.0
          %729 = vmatprep.mubr.f32.mxu0 0.0
          %730 = vmatmul.mubr.f32.gmra.mxu0 %v626
          %v731 = vpop.f32.mrf.mxu0
          %v732 = vadd.f32 %v663, %v731
          %v733 = vpop.f32.mrf.mxu0
          %734 = vmatprep.mubr.f32.mxu0 0.0
          %735 = vmatmul.mubr.f32.gmra.mxu0 %v627
          %v736 = vpop.f32.mrf.mxu0
          %v737 = vadd.f32 %v663, %v736
          %v738 = vpop.f32.mrf.mxu0
          %739 = vmatprep.mubr.f32.mxu0 0.0
          %740 = vmatmul.mubr.f32.gmra.mxu0 %v628
          %v741 = vpop.f32.mrf.mxu0
          %v742 = vadd.f32 %v663, %v741
          %v743 = vpop.f32.mrf.mxu0
          %744 = vmatprep.mubr.f32.mxu0 0.0
          %745 = vmatmul.mubr.f32.gmra.mxu0 %v629
          %v746 = vpop.f32.mrf.mxu0
          %v747 = vadd.f32 %v663, %v746
          %v748 = vpop.f32.mrf.mxu0
          %749 = vmatprep.mubr.f32.mxu0 0.0
          %750 = vmatmul.mubr.f32.gmra.mxu0 %v630
          %v751 = vpop.f32.mrf.mxu0
          %v752 = vadd.f32 %v663, %v751
          %v753 = vpop.f32.mrf.mxu0
          %754 = vmatprep.mubr.f32.mxu0 0.0
          %755 = vmatmul.mubr.f32.gmra.mxu0 %v631
          %v756 = vpop.f32.mrf.mxu0
          %v757 = vadd.f32 %v663, %v756
          %v758 = vpop.f32.mrf.mxu0
          %759 = vmatprep.mubr.f32.mxu0 0.0
          %760 = vmatmul.mubr.f32.gmra.mxu0 %v632
          %v761 = vpop.f32.mrf.mxu0
          %v762 = vadd.f32 %v663, %v761
          %v763 = vpop.f32.mrf.mxu0
          %764 = vmatprep.mubr.f32.mxu0 0.0
          %765 = vmatmul.mubr.f32.gmra.mxu0 %v633
          %v766 = vpop.f32.mrf.mxu0
          %v767 = vadd.f32 %v663, %v766
          %v768 = vpop.f32.mrf.mxu0
          %769 = vmatprep.mubr.f32.mxu0 0.0
          %770 = vmatmul.mubr.f32.gmra.mxu0 %v634
          %v771 = vpop.f32.mrf.mxu0
          %v772 = vadd.f32 %v663, %v771
          %v773 = vpop.f32.mrf.mxu0
          %774 = vmatprep.mubr.f32.mxu0 0.0
          %775 = vmatmul.mubr.f32.gmra.mxu0 %v635
          %v776 = vpop.f32.mrf.mxu0
          %v777 = vadd.f32 %v663, %v776
          %v778 = vpop.f32.mrf.mxu0
          %779 = vmatprep.mubr.f32.mxu0 0.0
          %780 = vmatmul.mubr.f32.gmra.mxu0 %v636
          %v781 = vpop.f32.mrf.mxu0
          %v782 = vadd.f32 %v663, %v781
          %v783 = vpop.f32.mrf.mxu0
          %784 = vmatprep.mubr.f32.mxu0 0.0
          %785 = vmatmul.mubr.f32.gmra.mxu0 %v637
          %v786 = vpop.f32.mrf.mxu0
          %v787 = vadd.f32 %v663, %v786
          %v788 = vpop.f32.mrf.mxu0
          %789 = vmatprep.mubr.f32.mxu0 0.0
          %790 = vmatmul.mubr.f32.gmra.mxu0 %v638
          %v791 = vpop.f32.mrf.mxu0
          %v792 = vadd.f32 %v663, %v791
          %v793 = vpop.f32.mrf.mxu0
          %794 = vmatprep.mubr.f32.mxu0 0.0
          %795 = vmatmul.mubr.f32.gmra.mxu0 %v639
          %v796 = vpop.f32.mrf.mxu0
          %v797 = vadd.f32 %v663, %v796
          %v798 = vpop.f32.mrf.mxu0
          %799 = vmatprep.mubr.f32.mxu0 0.0
          %800 = vmatmul.mubr.f32.gmra.mxu0 %v640
          %v801 = vpop.f32.mrf.mxu0
          %v802 = vadd.f32 %v663, %v801
          %v803 = vpop.f32.mrf.mxu0
          %804 = vmatprep.mubr.f32.mxu0 0.0
          %805 = vmatmul.mubr.f32.gmra.mxu0 %v641
          %v806 = vpop.f32.mrf.mxu0
          %v807 = vadd.f32 %v663, %v806
          %v808 = vpop.f32.mrf.mxu0
          %809 = vdwg.mxu0
          %v810 = vmax.f32 %v732, 0.0
          %v811 = vmax.f32 %v737, 0.0
          %v812 = vmax.f32 %v742, 0.0
          %v813 = vmax.f32 %v747, 0.0
          %v814 = vmax.f32 %v752, 0.0
          %v815 = vmax.f32 %v757, 0.0
          %v816 = vmax.f32 %v762, 0.0
          %v817 = vmax.f32 %v767, 0.0
          %v818 = vmax.f32 %v772, 0.0
          %v819 = vmax.f32 %v777, 0.0
          %v820 = vmax.f32 %v782, 0.0
          %v821 = vmax.f32 %v787, 0.0
          %v822 = vmax.f32 %v792, 0.0
          %v823 = vmax.f32 %v797, 0.0
          %v824 = vmax.f32 %v802, 0.0
          %v825 = vmax.f32 %v807, 0.0
          %v826 = vpack.c.bf16 %v811, %v810
          %v827 = vpack.c.bf16 %v813, %v812
          %v828 = vpack.c.bf16 %v815, %v814
          %v829 = vpack.c.bf16 %v817, %v816
          %v830 = vpack.c.bf16 %v819, %v818
          %v831 = vpack.c.bf16 %v821, %v820
          %v832 = vpack.c.bf16 %v823, %v822
          %v833 = vpack.c.bf16 %v825, %v824
          %v842 = vunpack.c.l.b16 %v826
          %v843 = vunpack.c.h.b16 %v826
          %v844 = vunpack.c.l.b16 %v827
          %v845 = vunpack.c.h.b16 %v827
          %v846 = vunpack.c.l.b16 %v828
          %v847 = vunpack.c.h.b16 %v828
          %v848 = vunpack.c.l.b16 %v829
          %v849 = vunpack.c.h.b16 %v829
          %v850 = vunpack.c.l.b16 %v830
          %v851 = vunpack.c.h.b16 %v830
          %v852 = vunpack.c.l.b16 %v831
          %v853 = vunpack.c.h.b16 %v831
          %v854 = vunpack.c.l.b16 %v832
          %v855 = vunpack.c.h.b16 %v832
          %v856 = vunpack.c.l.b16 %v833
          %v857 = vunpack.c.h.b16 %v833
          %v858 = vpack.c.b16 %v842, %v842
          %v859 = vpack.c.b16 %v843, %v843
          %v860 = vpack.c.b16 %v844, %v844
          %v861 = vpack.c.b16 %v845, %v845
          %v862 = vpack.c.b16 %v846, %v846
          %v863 = vpack.c.b16 %v847, %v847
          %v864 = vpack.c.b16 %v848, %v848
          %v865 = vpack.c.b16 %v849, %v849
          %v866 = vpack.c.b16 %v850, %v850
          %v867 = vpack.c.b16 %v851, %v851
          %v868 = vpack.c.b16 %v852, %v852
          %v869 = vpack.c.b16 %v853, %v853
          %v870 = vpack.c.b16 %v854, %v854
          %v871 = vpack.c.b16 %v855, %v855
          %v872 = vpack.c.b16 %v856, %v856
          %v873 = vpack.c.b16 %v857, %v857
          %890 = vst [vmem:[%s313] sm:$0xf] %v858
          %891 = vst [vmem:[%s313 + $0x4] sm:$0xf] %v859
          %892 = vst [vmem:[%s313 + $0x8] sm:$0xf] %v860
          %893 = vst [vmem:[%s313 + $0xc] sm:$0xf] %v861
          %894 = vst [vmem:[%s313 + $0x10] sm:$0xf] %v862
          %895 = vst [vmem:[%s313 + $0x14] sm:$0xf] %v863
          %896 = vst [vmem:[%s313 + $0x18] sm:$0xf] %v864
          %897 = vst [vmem:[%s313 + $0x1c] sm:$0xf] %v865
          %898 = vst [vmem:[%s313 + $0x20] sm:$0xf] %v866
          %899 = vst [vmem:[%s313 + $0x24] sm:$0xf] %v867
          %900 = vst [vmem:[%s313 + $0x28] sm:$0xf] %v868
          %901 = vst [vmem:[%s313 + $0x2c] sm:$0xf] %v869
          %902 = vst [vmem:[%s313 + $0x30] sm:$0xf] %v870
          %903 = vst [vmem:[%s313 + $0x34] sm:$0xf] %v871
          %904 = vst [vmem:[%s313 + $0x38] sm:$0xf] %v872
          %905 = vst [vmem:[%s313 + $0x3c] sm:$0xf] %v873
        $region60: #{tpu_custom_call.1} parent=35 // pred_fallthru
          _
        %s906 = sand.u32 %s162, 1
        %s907 = scalar_lea.sflag [#allocation8], %s906
        %s908 = sand.u32 %s162, 1
        %s909 = smul.addr %s908, 64
        %s910 = scalar_lea.vmem [#allocation12], %s909
        // Predicated region
        $region61: #{tpu_custom_call.1} parent=35 // pred_check
          %p911 = pneg %p172
        $region62: #{tpu_custom_call.1} parent=35 // pred_check_branch
          %913 = sbr.rel (%p911) target = $region64
        $region63: #{tpu_custom_call.1} parent=35 // pred_region
          %s914 = smul.u32 16, %s38
          %s916 = ssub.s32 1024, 1024
          %917 = vsyncadd %s907, %s916
          %s918 = smul.addr %s914, 64
          %s919 = scalar_lea.hbm %s6, %s918
          %s920 = sshll.u32 %s910, 4
          %s921 = int_to_ptr.vmem [resolvable:$true] %s920
          %926 = dma.vmem_to_hbm [thread:$0]  %s921, 1024, %s919, %s907, 64, 64, 4
        $region64: #{tpu_custom_call.1} parent=35 // pred_fallthru
          _
      $region36: #{tpu_custom_call.1} parent=5 // pred_fallthru
        _
      %p927 = scmp.le.s32.totalorder 2, %s29
      // Predicated region
      $region65: #{tpu_custom_call.1} parent=5 // pred_check
        %p928 = pneg %p927
      $region66: #{tpu_custom_call.1} parent=5 // pred_check_branch
        %930 = sbr.rel (%p928) target = $region68
      $region67: #{tpu_custom_call.1} parent=5 // pred_region
        %s931 = ssub.s32 %s29, 2
        // Predicated region
        $region69: #{tpu_custom_call.1} parent=67 // pred_check
          %p932 = pneg %p178
        $region70: #{tpu_custom_call.1} parent=67 // pred_check_branch
          %934 = sbr.rel (%p932) target = $region72
        $region71: #{tpu_custom_call.1} parent=67 // pred_region
          %s935 = sand.u32 %s163, 1
          %s936 = scalar_lea.sflag [#allocation8], %s935
          %s937 = sand.u32 %s163, 1
          %s938 = smul.addr %s937, 64
          %s939 = scalar_lea.vmem [#allocation12], %s938
          %940 = dma.done %s936, 1024
        $region72: #{tpu_custom_call.1} parent=67 // pred_fallthru
          _
      $region68: #{tpu_custom_call.1} parent=5 // pred_fallthru
        _
    $region6: #{tpu_custom_call.1} parent=1 // loop_footer
      %s33 = sadd.s32 1, %s29
    $region7: #{tpu_custom_call.1} parent=1 // loop_footer_branch
      %28 = sbr.rel target = $region3
    $region8: #{tpu_custom_call.1} parent=1 // loop_exit
      _
    %941 = vsyncpa [#allocation7], 1
    %s942 = scalar_lea.sflag [#allocation7], 1
    %943 = vsyncpa %s942, 1
    %944 = vsyncpa [#allocation10], 1
    %s945 = scalar_lea.sflag [#allocation10], 1
    %946 = vsyncpa %s945, 1
    %947 = vsyncpa [#allocation8], 1
    %s948 = scalar_lea.sflag [#allocation8], 1
    %949 = vsyncpa %s948, 1

</llo_original>
